<compile_context>
chip_gen: v7x
topology: tpu7x:2x2x1
jax: 0.10.0
libtpu: 0.0.40
codegen_flags: <defaults>
</compile_context>

<pallas_src>
import jax
import jax.numpy as jnp
from jax import lax
from jax.experimental import pallas as pl
from jax.experimental.pallas import tpu as pltpu


def _hidden_kernel(x_ref, w_ref, h_ref):
    # x_ref: (1, tq, F) bf16, w_ref: (F, F) bf16, h_ref: (1, tq, F) bf16
    h = jnp.dot(x_ref[0], w_ref[...], preferred_element_type=jnp.float32)
    h_ref[0] = h.astype(h_ref.dtype)


def _gram_kernel(hi_ref, hj_ref, o_ref):
    # hi_ref: (1, tq, F) bf16, hj_ref: (1, tn, F) bf16, o_ref: (1, tq, tn) f32
    # Contract the feature axis of both operands directly on the MXU; no
    # explicit .T (avoids XLU transpose passes and an (S, F) temporary).
    o_ref[0] = lax.dot_general(
        hi_ref[0], hj_ref[0],
        dimension_numbers=(((1,), (1,)), ((), ())),
        preferred_element_type=jnp.float32)


def _pick_tile(dim: int, candidates=(512, 256, 128)) -> int:
    for t in candidates:
        if dim % t == 0:
            return t
    return dim  # fall back to the full extent (needed when dim is not 128-aligned)


def pair_generation(text: jax.Array, weight: jax.Array) -> jax.Array:
    """text: (B, S, F), weight: (F, F) -> (B, S, S) float32."""
    B, S, F = text.shape
    assert weight.shape == (F, F)

    # bf16 MXU feed, f32 accumulation (TPU-native matmul path).
    x = text.astype(jnp.bfloat16)
    w = weight.astype(jnp.bfloat16)

    tq = _pick_tile(S)  # row tile of the sequence axis
    tn = tq             # column tile (square, 128-aligned output tiles)

    # ---- Pass 1: hidden = text @ W, computed/stored exactly once (bf16).
    hidden = pl.pallas_call(
        _hidden_kernel,
        out_shape=jax.ShapeDtypeStruct((B, S, F), jnp.bfloat16),
        grid_spec=pltpu.PrefetchScalarGridSpec(
            num_scalar_prefetch=0,
            grid=(B, S // tq),
            in_specs=[
                pl.BlockSpec((1, tq, F), lambda b, i: (b, i, 0)),
                pl.BlockSpec((F, F), lambda b, i: (0, 0)),  # weight reused every step
            ],
            out_specs=pl.BlockSpec((1, tq, F), lambda b, i: (b, i, 0)),
        ),
        compiler_params=pltpu.CompilerParams(
            dimension_semantics=("parallel", "parallel")),
        cost_estimate=pl.CostEstimate(
            flops=2 * B * S * F * F,
            bytes_accessed=2 * B * S * F * 2 + F * F * 2,
            transcendentals=0),
    )(x, w)

    # ---- Pass 2: output[b, i, j] = hidden_i @ hidden_j^T  (tiled Gram matrix).
    out = pl.pallas_call(
        _gram_kernel,
        out_shape=jax.ShapeDtypeStruct((B, S, S), jnp.float32),
        grid_spec=pltpu.PrefetchScalarGridSpec(
            num_scalar_prefetch=0,
            grid=(B, S // tq, S // tn),
            in_specs=[
                pl.BlockSpec((1, tq, F), lambda b, i, j: (b, i, 0)),
                pl.BlockSpec((1, tn, F), lambda b, i, j: (b, j, 0)),
            ],
            out_specs=pl.BlockSpec((1, tq, tn), lambda b, i, j: (b, i, j)),
        ),
        compiler_params=pltpu.CompilerParams(
            dimension_semantics=("parallel", "parallel", "parallel")),
        cost_estimate=pl.CostEstimate(
            flops=2 * B * S * S * F,
            bytes_accessed=2 * B * S * F * 2 + B * S * S * 4,
            transcendentals=0),
    )(hidden, hidden)

    return out


if __name__ == "__main__":
    key = jax.random.PRNGKey(0)
    k_text, k_w = jax.random.split(key)

    # Small but TPU-tile-aligned shapes (exercise a real 2x2 output-tile grid).
    B, S, F = 2, 256, 128
    text = jax.random.normal(k_text, (B, S, F), dtype=jnp.float32)
    # Deterministic stand-in for nn.Parameter(torch.FloatTensor(F, F)).
    weight = jax.random.normal(k_w, (F, F), dtype=jnp.float32) * 0.1

    out = jax.block_until_ready(pair_generation(text, weight))
    assert out.shape == (B, S, S) and out.dtype == jnp.float32

    # Matched-precision reference (bf16 MXU feed, f32 accumulate) -> tight check.
    tb = text.astype(jnp.bfloat16)
    wb = weight.astype(jnp.bfloat16)
    hid = jnp.einsum("bsf,fg->bsg", tb, wb,
                     preferred_element_type=jnp.float32).astype(jnp.bfloat16)
    ref = jnp.einsum("bsf,btf->bst", hid, hid,
                     preferred_element_type=jnp.float32)
    assert jnp.allclose(out, ref, atol=1e-2, rtol=1e-2)

    # Full-f32 semantic reference -> loose check (only bf16 feed error remains).
    hid32 = jnp.einsum("bsf,fg->bsg", text, weight,
                       preferred_element_type=jnp.float32)
    ref32 = jnp.einsum("bsf,btf->bst", hid32, hid32,
                       preferred_element_type=jnp.float32)
    assert jnp.allclose(out, ref32, atol=1.0, rtol=5e-2)

    print("KERNEL_OK")
</pallas_src>

<mosaic_0001>
module attributes {stable_mosaic.version = 11 : i64} {
  func.func @_hidden_kernel(%arg0: i32, %arg1: i32, %arg2: memref<1x256x128xbf16, #tpu.memory_space<vmem>>, %arg3: memref<128x128xbf16, #tpu.memory_space<vmem>>, %arg4: memref<1x256x128xbf16, #tpu.memory_space<vmem>>) attributes {dimension_semantics = [#tpu.dimension_semantics<parallel>, #tpu.dimension_semantics<parallel>], iteration_bounds = array<i64: 2, 1>, scalar_prefetch = 0 : i64, scratch_operands = 0 : i64, tpu.core_type = #tpu.core_type<tc>, window_params = [{transform_indices = @transform_0, window_bounds = array<i64: 1, 256, 128>}, {pipeline_mode = #tpu.pipeline_mode<synchronous>, transform_indices = @transform_1, window_bounds = array<i64: 128, 128>}, {transform_indices = @transform_2, window_bounds = array<i64: 1, 256, 128>}]} {
    %c0 = arith.constant 0 : index
    %c0_0 = arith.constant 0 : index
    %c0_1 = arith.constant 0 : index
    %0 = vector.load %arg2[%c0, %c0_0, %c0_1] : memref<1x256x128xbf16, #tpu.memory_space<vmem>>, vector<1x256x128xbf16>
    %1 = vector.shape_cast %0 : vector<1x256x128xbf16> to vector<256x128xbf16>
    %c0_2 = arith.constant 0 : index
    %c0_3 = arith.constant 0 : index
    %2 = vector.load %arg3[%c0_2, %c0_3] : memref<128x128xbf16, #tpu.memory_space<vmem>>, vector<128x128xbf16>
    %cst = arith.constant dense<0.000000e+00> : vector<256x128xf32>
    %3 = tpu.matmul %1, %2, %cst {dimension_numbers = #tpu.dot_dimension_numbers<[1], [0], [0], [1], [0, 0, 1, 1], [], []>} : vector<256x128xbf16>, vector<128x128xbf16>, vector<256x128xf32> -> vector<256x128xf32>
    %4 = arith.truncf %3 : vector<256x128xf32> to vector<256x128xbf16>
    %c0_4 = arith.constant 0 : index
    %c0_5 = arith.constant 0 : index
    %c0_6 = arith.constant 0 : index
    %5 = vector.load %arg4[%c0_4, %c0_5, %c0_6] : memref<1x256x128xbf16, #tpu.memory_space<vmem>>, vector<1x256x128xbf16>
    %6 = vector.shape_cast %5 : vector<1x256x128xbf16> to vector<256x128xbf16>
    %7 = vector.shape_cast %4 : vector<256x128xbf16> to vector<1x256x128xbf16>
    tpu.vector_store %arg4[%c0_4, %c0_5, %c0_6], %7 {strides = array<i32>} : memref<1x256x128xbf16, #tpu.memory_space<vmem>>, vector<1x256x128xbf16>,
    return
  }
  func.func @transform_0(%arg0: i32, %arg1: i32) -> (i32, i32, i32) {
    %c0_i32 = arith.constant 0 : i32
    %c0_i32_0 = arith.constant 0 : i32
    return %arg0, %arg1, %c0_i32 : i32, i32, i32
  }
  func.func @transform_1(%arg0: i32, %arg1: i32) -> (i32, i32) {
    %c0_i32 = arith.constant 0 : i32
    %c0_i32_0 = arith.constant 0 : i32
    %c0_i32_1 = arith.constant 0 : i32
    return %c0_i32, %c0_i32_0 : i32, i32
  }
  func.func @transform_2(%arg0: i32, %arg1: i32) -> (i32, i32, i32) {
    %c0_i32 = arith.constant 0 : i32
    %c0_i32_0 = arith.constant 0 : i32
    return %arg0, %arg1, %c0_i32 : i32, i32, i32
  }
}

</mosaic_0001>

<llo_original>
// kernel: tpu_custom_call.1
$region0: #{tpu_custom_call.1}
  #allocation0 [shape = 'u32[]', space=smem, size = 0x4, offset = 0x4, fixed_abs, tag = 'smem constant byte address 0x4 - core index']
  #allocation1 [shape = 'u32[144,128]{1,0:T(1,128)}', space=vmem, size = 0x12000, scoped, tag = 'internal scratch']
  %s0 = inlined_call_operand.hbm [shape: bf16[2,256,128], index: 0, kind: input, shape index: {}]
  %s1 = inlined_call_operand.hbm [shape: bf16[128,128], index: 1, kind: input, shape index: {}]
  %s2 = inlined_call_operand.hbm [shape: bf16[2,256,128], index: 2, kind: output, shape index: {}]
  %s3 = sld [smem:[#allocation0]]
  $region49: #{tpu_custom_call.1} parent=0
    _
  %s5 = ssub.s32 1, %s3
  %s6 = scalar_select 0, %s5, %s3
  $region1: #{tpu_custom_call.1} parent=0
    #allocation2 [shape = 'u8[131072]{0}', space=vmem, size = 0x20000, scoped, tag = 'input window, operand 0']
    #allocation3 [shape = 's32[2]{0}', space=sflag, size = 0x8, scoped, tag = 'scoped memory for tpu_custom_call.1']
    #allocation4 [shape = 's32[2]{0}', space=sflag, size = 0x8, scoped, tag = 'scoped memory for tpu_custom_call.1']
    #allocation5 [shape = 'u8[32768]{0}', space=vmem, size = 0x8000, scoped, tag = 'input window, operand 1, single buffered']
    #allocation6 [shape = 's32[1]{0}', space=sflag, size = 0x4, scoped, tag = 'scoped memory for tpu_custom_call.1']
    #allocation7 [shape = 'u8[131072]{0}', space=vmem, size = 0x20000, scoped, tag = 'output window, operand 0']
    %7 = vsyncpa [#allocation3], 0
    %s8 = scalar_lea.sflag [#allocation3], 1
    %9 = vsyncpa %s8, 0
    %10 = vsyncpa [#allocation6], 0
    %11 = vsyncpa [#allocation4], 0
    %s12 = scalar_lea.sflag [#allocation4], 1
    %13 = vsyncpa %s12, 0
    loop: start=0, step=1, limit=4
    $region2: #{tpu_custom_call.1} parent=1 // loop_pre_header
      _
    $region3: #{tpu_custom_call.1} parent=1 // loop_header
      %s15 = sphi 0, %s19
      %p16 = scmp.ge.s32.totalorder %s15, 4
      %s22 = sphi 0, %s34
      %s23 = sphi 0, %s30
      %s24 = sphi 0, %s22
      %s25 = sphi 0, %s23
      %s26 = sphi 0, %s24
      %s27 = sphi 0, %s25
      %s39 = sphi 0, %s41
      %s42 = sphi 0, %s39
      %s43 = sphi 0, %s42
      %s59 = sphi 0, %s43
      %s63 = sphi 0, %s63
      %s65 = sphi 0, %s63
      %s66 = sphi 0, %s65
      %s80 = sphi 0, %s66
      %s88 = sphi 0, %s90
      %s91 = sphi 0, %s88
      %s92 = sphi 0, %s91
      %s108 = sphi 0, %s92
    $region4: #{tpu_custom_call.1} parent=1 // loop_header_branch
      %18 = sbr.rel (%p16) target = $region8
    $region5: #{tpu_custom_call.1} parent=1 // loop_body
      %s20 = ssub.s32 %s15, 1
      %s21 = ssub.s32 %s15, 2
      %s28 = sadd.s32 1, %s23
      %p29 = scmp.ge.s32.totalorder %s28, 1
      %s30 = scalar_select %p29, 0, %s28
      %s31 = sadd.s32 1, %s22
      %s32 = scalar_select %p29, %s31, %s22
      %p33 = scmp.ge.s32.totalorder %s32, 2
      %s34 = scalar_select %p33, 0, %s32
      %s35 = ssub.s32 %s22, %s34
      %s36 = ssub.s32 %s23, %s30
      %s37 = sor.u32 %s35, %s36
      %p38 = scmp.eq.s32.totalorder %s37, 0
      %s40 = sadd.s32 %s39, 1
      %s41 = scalar_select %p38, %s39, %s40
      %p44 = pneg %p38
      %p45 = scmp.eq.s32.totalorder %s15, 1
      %p46 = por %p44, %p45
      %p47 = scmp.ne.s32.totalorder %s39, %s42
      %p48 = scmp.eq.s32.totalorder %s15, 0
      %p49 = por %p47, %p48
      %p50 = scmp.ne.s32.totalorder %s39, %s42
      %p51 = scmp.eq.s32.totalorder %s20, 1
      %p52 = por %p50, %p51
      %p53 = scmp.ne.s32.totalorder %s42, %s43
      %p54 = scmp.eq.s32.totalorder %s20, 0
      %p55 = por %p53, %p54
      %p56 = scmp.ne.s32.totalorder %s42, %s43
      %p57 = scmp.eq.s32.totalorder %s21, 1
      %p58 = por %p56, %p57
      %p60 = scmp.ne.s32.totalorder %s43, %s59
      %p61 = scmp.eq.s32.totalorder %s21, 0
      %p62 = por %p60, %p61
      %s64 = sadd.s32 %s63, 1
      %p67 = scmp.eq.s32.totalorder %s15, 1
      %p68 = scmp.ne.s32.totalorder %s63, %s65
      %p69 = scmp.eq.s32.totalorder %s15, 0
      %p70 = por %p68, %p69
      %p71 = scmp.ne.s32.totalorder %s63, %s65
      %p72 = scmp.eq.s32.totalorder %s20, 1
      %p73 = por %p71, %p72
      %p74 = scmp.ne.s32.totalorder %s65, %s66
      %p75 = scmp.eq.s32.totalorder %s20, 0
      %p76 = por %p74, %p75
      %p77 = scmp.ne.s32.totalorder %s65, %s66
      %p78 = scmp.eq.s32.totalorder %s21, 1
      %p79 = por %p77, %p78
      %p81 = scmp.ne.s32.totalorder %s66, %s80
      %p82 = scmp.eq.s32.totalorder %s21, 0
      %p83 = por %p81, %p82
      %s84 = ssub.s32 %s22, %s34
      %s85 = ssub.s32 %s23, %s30
      %s86 = sor.u32 %s84, %s85
      %p87 = scmp.eq.s32.totalorder %s86, 0
      %s89 = sadd.s32 %s88, 1
      %s90 = scalar_select %p87, %s88, %s89
      %p93 = pneg %p87
      %p94 = scmp.eq.s32.totalorder %s15, 1
      %p95 = por %p93, %p94
      %p96 = scmp.ne.s32.totalorder %s88, %s91
      %p97 = scmp.eq.s32.totalorder %s15, 0
      %p98 = por %p96, %p97
      %p99 = scmp.ne.s32.totalorder %s88, %s91
      %p100 = scmp.eq.s32.totalorder %s20, 1
      %p101 = por %p99, %p100
      %p102 = scmp.ne.s32.totalorder %s91, %s92
      %p103 = scmp.eq.s32.totalorder %s20, 0
      %p104 = por %p102, %p103
      %p105 = scmp.ne.s32.totalorder %s91, %s92
      %p106 = scmp.eq.s32.totalorder %s21, 1
      %p107 = por %p105, %p106
      %p109 = scmp.ne.s32.totalorder %s92, %s108
      %p110 = scmp.eq.s32.totalorder %s21, 0
      %p111 = por %p109, %p110
      %p112 = scmp.le.s32.totalorder 1, %s15
      %p113 = scmp.lt.s32.totalorder %s15, 3
      %p114 = pnand %p112, %p113
      %p115 = pneg %p114
      // Predicated region
      $region9: #{tpu_custom_call.1} parent=5 // pred_check
        _
      $region10: #{tpu_custom_call.1} parent=5 // pred_check_branch
        %117 = sbr.rel (%p114) target = $region12
      $region11: #{tpu_custom_call.1} parent=5 // pred_region
        %s118 = ssub.s32 %s15, 1
        // Predicated region
        $region13: #{tpu_custom_call.1} parent=11 // pred_check
          %p119 = pneg %p76
        $region14: #{tpu_custom_call.1} parent=11 // pred_check_branch
          %121 = sbr.rel (%p119) target = $region16
        $region15: #{tpu_custom_call.1} parent=11 // pred_region
          %s123 = ssub.s32 1024, 1024
          %124 = vsyncadd [#allocation6], %s123
          %s125 = sshll.u32 [#allocation5], 4
          %s126 = int_to_ptr.vmem [resolvable:$true] %s125
          %131 = dma.hbm_to_vmem [thread:$0]  %s1, 1024, %s126, [#allocation6], 64, 64, 4
        $region16: #{tpu_custom_call.1} parent=11 // pred_fallthru
          _
      $region12: #{tpu_custom_call.1} parent=5 // pred_fallthru
        _
      %p132 = scmp.lt.s32.totalorder %s15, 2
      // Predicated region
      $region17: #{tpu_custom_call.1} parent=5 // pred_check
        %p133 = pneg %p132
      $region18: #{tpu_custom_call.1} parent=5 // pred_check_branch
        %135 = sbr.rel (%p133) target = $region20
      $region19: #{tpu_custom_call.1} parent=5 // pred_region
        // Predicated region
        $region21: #{tpu_custom_call.1} parent=19 // pred_check
          %p136 = pneg %p49
        $region22: #{tpu_custom_call.1} parent=19 // pred_check_branch
          %138 = sbr.rel (%p136) target = $region24
        $region23: #{tpu_custom_call.1} parent=19 // pred_region
          %s139 = sand.u32 %s39, 1
          %s140 = scalar_lea.sflag [#allocation3], %s139
          %s141 = sand.u32 %s39, 1
          %s142 = smul.addr %s141, 128
          %s143 = scalar_lea.vmem [#allocation2], %s142
          %s144 = smul.u32 32, %s23
          %s146 = ssub.s32 2048, 2048
          %147 = vsyncadd %s140, %s146
          %s148 = smul.addr %s22, 32
          %s149 = sadd.s32 %s144, %s148
          %s150 = smul.addr %s149, 64
          %s151 = scalar_lea.hbm %s0, %s150
          %s152 = sshll.u32 %s143, 4
          %s153 = int_to_ptr.vmem [resolvable:$true] %s152
          %158 = dma.hbm_to_vmem [thread:$0]  %s151, 2048, %s153, %s140, 64, 64, 4
        $region24: #{tpu_custom_call.1} parent=19 // pred_fallthru
          _
      $region20: #{tpu_custom_call.1} parent=5 // pred_fallthru
        _
      %p159 = scmp.le.s32.totalorder 1, %s15
      %p160 = scmp.lt.s32.totalorder %s15, 3
      %p161 = pnand %p159, %p160
      %p162 = pneg %p161
      // Predicated region
      $region25: #{tpu_custom_call.1} parent=5 // pred_check
        _
      $region26: #{tpu_custom_call.1} parent=5 // pred_check_branch
        %164 = sbr.rel (%p161) target = $region28
      $region27: #{tpu_custom_call.1} parent=5 // pred_region
        %s165 = ssub.s32 %s15, 1
        %s166 = sand.u32 %s42, 1
        %s167 = scalar_lea.sflag [#allocation3], %s166
        %s168 = sand.u32 %s42, 1
        %s169 = smul.addr %s168, 128
        %s170 = scalar_lea.vmem [#allocation2], %s169
        // Predicated region
        $region29: #{tpu_custom_call.1} parent=27 // pred_check
          %p171 = pneg %p55
        $region30: #{tpu_custom_call.1} parent=27 // pred_check_branch
          %173 = sbr.rel (%p171) target = $region32
        $region31: #{tpu_custom_call.1} parent=27 // pred_region
          %174 = dma.done %s167, 2048
        $region32: #{tpu_custom_call.1} parent=27 // pred_fallthru
          _
        // Predicated region
        $region33: #{tpu_custom_call.1} parent=27 // pred_check
          %p175 = pneg %p76
        $region34: #{tpu_custom_call.1} parent=27 // pred_check_branch
          %177 = sbr.rel (%p175) target = $region36
        $region35: #{tpu_custom_call.1} parent=27 // pred_region
          %178 = dma.done [#allocation6], 1024
        $region36: #{tpu_custom_call.1} parent=27 // pred_fallthru
          _
        %s179 = sand.u32 %s42, 1
        %s180 = scalar_lea.sflag [#allocation3], %s179
        %s181 = sand.u32 %s42, 1
        %s182 = smul.addr %s181, 128
        %s183 = scalar_lea.vmem [#allocation2], %s182
        %p184 = pneg %p55
        %p185 = pneg %p52
        %p186 = pneg %p76
        %p187 = pneg %p73
        %p188 = pneg %p104
        %p189 = pneg %p101
        %s190 = sand.u32 %s91, 1
        %s191 = scalar_lea.sflag [#allocation4], %s190
        %s192 = sand.u32 %s91, 1
        %s193 = smul.addr %s192, 128
        %s194 = scalar_lea.vmem [#allocation7], %s193
        %s195 = smul.u32 32, %s25
        %s196 = smul.u32 32, %s25
        %v198 = vld [vmem:[%s170] sm:$0xf]
        %v199 = vld [vmem:[%s170 + $0x4] sm:$0xf]
        %v200 = vld [vmem:[%s170 + $0x8] sm:$0xf]
        %v201 = vld [vmem:[%s170 + $0xc] sm:$0xf]
        %v202 = vld [vmem:[%s170 + $0x10] sm:$0xf]
        %v203 = vld [vmem:[%s170 + $0x14] sm:$0xf]
        %v204 = vld [vmem:[%s170 + $0x18] sm:$0xf]
        %v205 = vld [vmem:[%s170 + $0x1c] sm:$0xf]
        %v206 = vld [vmem:[%s170 + $0x20] sm:$0xf]
        %v207 = vld [vmem:[%s170 + $0x24] sm:$0xf]
        %v208 = vld [vmem:[%s170 + $0x28] sm:$0xf]
        %v209 = vld [vmem:[%s170 + $0x2c] sm:$0xf]
        %v210 = vld [vmem:[%s170 + $0x30] sm:$0xf]
        %v211 = vld [vmem:[%s170 + $0x34] sm:$0xf]
        %v212 = vld [vmem:[%s170 + $0x38] sm:$0xf]
        %v213 = vld [vmem:[%s170 + $0x3c] sm:$0xf]
        %v214 = vld [vmem:[%s170 + $0x40] sm:$0xf]
        %v215 = vld [vmem:[%s170 + $0x44] sm:$0xf]
        %v216 = vld [vmem:[%s170 + $0x48] sm:$0xf]
        %v217 = vld [vmem:[%s170 + $0x4c] sm:$0xf]
        %v218 = vld [vmem:[%s170 + $0x50] sm:$0xf]
        %v219 = vld [vmem:[%s170 + $0x54] sm:$0xf]
        %v220 = vld [vmem:[%s170 + $0x58] sm:$0xf]
        %v221 = vld [vmem:[%s170 + $0x5c] sm:$0xf]
        %v222 = vld [vmem:[%s170 + $0x60] sm:$0xf]
        %v223 = vld [vmem:[%s170 + $0x64] sm:$0xf]
        %v224 = vld [vmem:[%s170 + $0x68] sm:$0xf]
        %v225 = vld [vmem:[%s170 + $0x6c] sm:$0xf]
        %v226 = vld [vmem:[%s170 + $0x70] sm:$0xf]
        %v227 = vld [vmem:[%s170 + $0x74] sm:$0xf]
        %v228 = vld [vmem:[%s170 + $0x78] sm:$0xf]
        %v229 = vld [vmem:[%s170 + $0x7c] sm:$0xf]
        %v230 = vld [vmem:[#allocation5] sm:$0xf]
        %v231 = vld [vmem:[#allocation5 + $0x4] sm:$0xf]
        %v232 = vld [vmem:[#allocation5 + $0x8] sm:$0xf]
        %v233 = vld [vmem:[#allocation5 + $0xc] sm:$0xf]
        %v234 = vld [vmem:[#allocation5 + $0x10] sm:$0xf]
        %v235 = vld [vmem:[#allocation5 + $0x14] sm:$0xf]
        %v236 = vld [vmem:[#allocation5 + $0x18] sm:$0xf]
        %v237 = vld [vmem:[#allocation5 + $0x1c] sm:$0xf]
        %v238 = vld [vmem:[#allocation5 + $0x20] sm:$0xf]
        %v239 = vld [vmem:[#allocation5 + $0x24] sm:$0xf]
        %v240 = vld [vmem:[#allocation5 + $0x28] sm:$0xf]
        %v241 = vld [vmem:[#allocation5 + $0x2c] sm:$0xf]
        %v242 = vld [vmem:[#allocation5 + $0x30] sm:$0xf]
        %v243 = vld [vmem:[#allocation5 + $0x34] sm:$0xf]
        %v244 = vld [vmem:[#allocation5 + $0x38] sm:$0xf]
        %v245 = vld [vmem:[#allocation5 + $0x3c] sm:$0xf]
        %v278 = vunpack.c.l.b16 %v198
        %v279 = vunpack.c.l.b16 %v199
        %v280 = vunpack.c.l.b16 %v200
        %v281 = vunpack.c.l.b16 %v201
        %v282 = vunpack.c.l.b16 %v202
        %v283 = vunpack.c.l.b16 %v203
        %v284 = vunpack.c.l.b16 %v204
        %v285 = vunpack.c.l.b16 %v205
        %v286 = vunpack.c.l.b16 %v206
        %v287 = vunpack.c.l.b16 %v207
        %v288 = vunpack.c.l.b16 %v208
        %v289 = vunpack.c.l.b16 %v209
        %v290 = vunpack.c.l.b16 %v210
        %v291 = vunpack.c.l.b16 %v211
        %v292 = vunpack.c.l.b16 %v212
        %v293 = vunpack.c.l.b16 %v213
        %v294 = vunpack.c.l.b16 %v214
        %v295 = vunpack.c.l.b16 %v215
        %v296 = vunpack.c.l.b16 %v216
        %v297 = vunpack.c.l.b16 %v217
        %v298 = vunpack.c.l.b16 %v218
        %v299 = vunpack.c.l.b16 %v219
        %v300 = vunpack.c.l.b16 %v220
        %v301 = vunpack.c.l.b16 %v221
        %v302 = vunpack.c.l.b16 %v222
        %v303 = vunpack.c.l.b16 %v223
        %v304 = vunpack.c.l.b16 %v224
        %v305 = vunpack.c.l.b16 %v225
        %v306 = vunpack.c.l.b16 %v226
        %v307 = vunpack.c.l.b16 %v227
        %v308 = vunpack.c.l.b16 %v228
        %v309 = vunpack.c.l.b16 %v229
        %v310 = vpack.c.b16 %v279, %v278
        %v311 = vpack.c.b16 %v281, %v280
        %v312 = vpack.c.b16 %v283, %v282
        %v313 = vpack.c.b16 %v285, %v284
        %v314 = vpack.c.b16 %v287, %v286
        %v315 = vpack.c.b16 %v289, %v288
        %v316 = vpack.c.b16 %v291, %v290
        %v317 = vpack.c.b16 %v293, %v292
        %v318 = vpack.c.b16 %v295, %v294
        %v319 = vpack.c.b16 %v297, %v296
        %v320 = vpack.c.b16 %v299, %v298
        %v321 = vpack.c.b16 %v301, %v300
        %v322 = vpack.c.b16 %v303, %v302
        %v323 = vpack.c.b16 %v305, %v304
        %v324 = vpack.c.b16 %v307, %v306
        %v325 = vpack.c.b16 %v309, %v308
        %v358 = vunpack.c.l.b16 %v230
        %v359 = vunpack.c.l.b16 %v231
        %v360 = vunpack.c.l.b16 %v232
        %v361 = vunpack.c.l.b16 %v233
        %v362 = vunpack.c.l.b16 %v234
        %v363 = vunpack.c.l.b16 %v235
        %v364 = vunpack.c.l.b16 %v236
        %v365 = vunpack.c.l.b16 %v237
        %v366 = vunpack.c.l.b16 %v238
        %v367 = vunpack.c.l.b16 %v239
        %v368 = vunpack.c.l.b16 %v240
        %v369 = vunpack.c.l.b16 %v241
        %v370 = vunpack.c.l.b16 %v242
        %v371 = vunpack.c.l.b16 %v243
        %v372 = vunpack.c.l.b16 %v244
        %v373 = vunpack.c.l.b16 %v245
        %v374 = vpack.c.b16 %v359, %v358
        %v375 = vpack.c.b16 %v361, %v360
        %v376 = vpack.c.b16 %v363, %v362
        %v377 = vpack.c.b16 %v365, %v364
        %v378 = vpack.c.b16 %v367, %v366
        %v379 = vpack.c.b16 %v369, %v368
        %v380 = vpack.c.b16 %v371, %v370
        %v381 = vpack.c.b16 %v373, %v372
        %390 = vmatprep.subr.bf16.mxu0 0
        %391 = vmatpush1.bf16.msra.mxu0 %v374
        %392 = vmatprep.subr.bf16.mxu0 0
        %393 = vmatpush1.bf16.msra.mxu0 %v375
        %394 = vmatprep.subr.bf16.mxu0 0
        %395 = vmatpush1.bf16.msra.mxu0 %v376
        %396 = vmatprep.subr.bf16.mxu0 0
        %397 = vmatpush1.bf16.msra.mxu0 %v377
        %398 = vmatprep.subr.bf16.mxu0 0
        %399 = vmatpush1.bf16.msra.mxu0 %v378
        %400 = vmatprep.subr.bf16.mxu0 0
        %401 = vmatpush1.bf16.msra.mxu0 %v379
        %402 = vmatprep.subr.bf16.mxu0 0
        %403 = vmatpush1.bf16.msra.mxu0 %v380
        %404 = vmatprep.subr.bf16.mxu0 0
        %405 = vmatpush1.bf16.msra.mxu0 %v381
        %406 = vmatprep.subr.bf16.mxu0 0
        %407 = vmatpush1.bf16.msra.mxu0 0
        %408 = vmatprep.subr.bf16.mxu0 0
        %409 = vmatpush1.bf16.msra.mxu0 0
        %410 = vmatprep.subr.bf16.mxu0 0
        %411 = vmatpush1.bf16.msra.mxu0 0
        %412 = vmatprep.subr.bf16.mxu0 0
        %413 = vmatpush1.bf16.msra.mxu0 0
        %414 = vmatprep.subr.bf16.mxu0 0
        %415 = vmatpush1.bf16.msra.mxu0 0
        %416 = vmatprep.subr.bf16.mxu0 0
        %417 = vmatpush1.bf16.msra.mxu0 0
        %418 = vmatprep.subr.bf16.mxu0 0
        %419 = vmatpush1.bf16.msra.mxu0 0
        %420 = vmatprep.subr.bf16.mxu0 0
        %421 = vmatpush1.bf16.msra.mxu0 0
        %422 = vmatprep.mubr.bf16.mxu0 0
        %423 = vmatmul.mubr.bf16.gmra.mrb[0].mxu0 %v310
        %v424 = vpop.f32.mrb[0].mxu0
        %v425 = vadd.f32 0.0, %v424
        %v426 = vpop.f32.mrb[0].mxu0
        %v427 = vpop.f32.mrb[0].mxu0
        %v428 = vadd.f32 0.0, %v427
        %v429 = vpop.f32.mrb[0].mxu0
        %430 = vmatprep.mubr.bf16.mxu0 0
        %431 = vmatmul.mubr.bf16.gmra.mrb[0].mxu0 %v311
        %v432 = vpop.f32.mrb[0].mxu0
        %v433 = vadd.f32 0.0, %v432
        %v434 = vpop.f32.mrb[0].mxu0
        %v435 = vpop.f32.mrb[0].mxu0
        %v436 = vadd.f32 0.0, %v435
        %v437 = vpop.f32.mrb[0].mxu0
        %438 = vmatprep.mubr.bf16.mxu0 0
        %439 = vmatmul.mubr.bf16.gmra.mrb[0].mxu0 %v312
        %v440 = vpop.f32.mrb[0].mxu0
        %v441 = vadd.f32 0.0, %v440
        %v442 = vpop.f32.mrb[0].mxu0
        %v443 = vpop.f32.mrb[0].mxu0
        %v444 = vadd.f32 0.0, %v443
        %v445 = vpop.f32.mrb[0].mxu0
        %446 = vmatprep.mubr.bf16.mxu0 0
        %447 = vmatmul.mubr.bf16.gmra.mrb[0].mxu0 %v313
        %v448 = vpop.f32.mrb[0].mxu0
        %v449 = vadd.f32 0.0, %v448
        %v450 = vpop.f32.mrb[0].mxu0
        %v451 = vpop.f32.mrb[0].mxu0
        %v452 = vadd.f32 0.0, %v451
        %v453 = vpop.f32.mrb[0].mxu0
        %454 = vmatprep.mubr.bf16.mxu0 0
        %455 = vmatmul.mubr.bf16.gmra.mrb[0].mxu0 %v314
        %v456 = vpop.f32.mrb[0].mxu0
        %v457 = vadd.f32 0.0, %v456
        %v458 = vpop.f32.mrb[0].mxu0
        %v459 = vpop.f32.mrb[0].mxu0
        %v460 = vadd.f32 0.0, %v459
        %v461 = vpop.f32.mrb[0].mxu0
        %462 = vmatprep.mubr.bf16.mxu0 0
        %463 = vmatmul.mubr.bf16.gmra.mrb[0].mxu0 %v315
        %v464 = vpop.f32.mrb[0].mxu0
        %v465 = vadd.f32 0.0, %v464
        %v466 = vpop.f32.mrb[0].mxu0
        %v467 = vpop.f32.mrb[0].mxu0
        %v468 = vadd.f32 0.0, %v467
        %v469 = vpop.f32.mrb[0].mxu0
        %470 = vmatprep.mubr.bf16.mxu0 0
        %471 = vmatmul.mubr.bf16.gmra.mrb[0].mxu0 %v316
        %v472 = vpop.f32.mrb[0].mxu0
        %v473 = vadd.f32 0.0, %v472
        %v474 = vpop.f32.mrb[0].mxu0
        %v475 = vpop.f32.mrb[0].mxu0
        %v476 = vadd.f32 0.0, %v475
        %v477 = vpop.f32.mrb[0].mxu0
        %478 = vmatprep.mubr.bf16.mxu0 0
        %479 = vmatmul.mubr.bf16.gmra.mrb[0].mxu0 %v317
        %v480 = vpop.f32.mrb[0].mxu0
        %v481 = vadd.f32 0.0, %v480
        %v482 = vpop.f32.mrb[0].mxu0
        %v483 = vpop.f32.mrb[0].mxu0
        %v484 = vadd.f32 0.0, %v483
        %v485 = vpop.f32.mrb[0].mxu0
        %486 = vmatprep.mubr.bf16.mxu0 0
        %487 = vmatmul.mubr.bf16.gmra.mrb[0].mxu0 %v318
        %v488 = vpop.f32.mrb[0].mxu0
        %v489 = vadd.f32 0.0, %v488
        %v490 = vpop.f32.mrb[0].mxu0
        %v491 = vpop.f32.mrb[0].mxu0
        %v492 = vadd.f32 0.0, %v491
        %v493 = vpop.f32.mrb[0].mxu0
        %494 = vmatprep.mubr.bf16.mxu0 0
        %495 = vmatmul.mubr.bf16.gmra.mrb[0].mxu0 %v319
        %v496 = vpop.f32.mrb[0].mxu0
        %v497 = vadd.f32 0.0, %v496
        %v498 = vpop.f32.mrb[0].mxu0
        %v499 = vpop.f32.mrb[0].mxu0
        %v500 = vadd.f32 0.0, %v499
        %v501 = vpop.f32.mrb[0].mxu0
        %502 = vmatprep.mubr.bf16.mxu0 0
        %503 = vmatmul.mubr.bf16.gmra.mrb[0].mxu0 %v320
        %v504 = vpop.f32.mrb[0].mxu0
        %v505 = vadd.f32 0.0, %v504
        %v506 = vpop.f32.mrb[0].mxu0
        %v507 = vpop.f32.mrb[0].mxu0
        %v508 = vadd.f32 0.0, %v507
        %v509 = vpop.f32.mrb[0].mxu0
        %510 = vmatprep.mubr.bf16.mxu0 0
        %511 = vmatmul.mubr.bf16.gmra.mrb[0].mxu0 %v321
        %v512 = vpop.f32.mrb[0].mxu0
        %v513 = vadd.f32 0.0, %v512
        %v514 = vpop.f32.mrb[0].mxu0
        %v515 = vpop.f32.mrb[0].mxu0
        %v516 = vadd.f32 0.0, %v515
        %v517 = vpop.f32.mrb[0].mxu0
        %518 = vmatprep.mubr.bf16.mxu0 0
        %519 = vmatmul.mubr.bf16.gmra.mrb[0].mxu0 %v322
        %v520 = vpop.f32.mrb[0].mxu0
        %v521 = vadd.f32 0.0, %v520
        %v522 = vpop.f32.mrb[0].mxu0
        %v523 = vpop.f32.mrb[0].mxu0
        %v524 = vadd.f32 0.0, %v523
        %v525 = vpop.f32.mrb[0].mxu0
        %526 = vmatprep.mubr.bf16.mxu0 0
        %527 = vmatmul.mubr.bf16.gmra.mrb[0].mxu0 %v323
        %v528 = vpop.f32.mrb[0].mxu0
        %v529 = vadd.f32 0.0, %v528
        %v530 = vpop.f32.mrb[0].mxu0
        %v531 = vpop.f32.mrb[0].mxu0
        %v532 = vadd.f32 0.0, %v531
        %v533 = vpop.f32.mrb[0].mxu0
        %534 = vmatprep.mubr.bf16.mxu0 0
        %535 = vmatmul.mubr.bf16.gmra.mrb[0].mxu0 %v324
        %v536 = vpop.f32.mrb[0].mxu0
        %v537 = vadd.f32 0.0, %v536
        %v538 = vpop.f32.mrb[0].mxu0
        %v539 = vpop.f32.mrb[0].mxu0
        %v540 = vadd.f32 0.0, %v539
        %v541 = vpop.f32.mrb[0].mxu0
        %542 = vmatprep.mubr.bf16.mxu0 0
        %543 = vmatmul.mubr.bf16.gmra.mrb[0].mxu0 %v325
        %v544 = vpop.f32.mrb[0].mxu0
        %v545 = vadd.f32 0.0, %v544
        %v546 = vpop.f32.mrb[0].mxu0
        %v547 = vpop.f32.mrb[0].mxu0
        %v548 = vadd.f32 0.0, %v547
        %v549 = vpop.f32.mrb[0].mxu0
        %550 = vdwg.mxu0
        %v551 = vpack.c.bf16 %v428, %v425
        %v552 = vpack.c.bf16 %v436, %v433
        %v553 = vpack.c.bf16 %v444, %v441
        %v554 = vpack.c.bf16 %v452, %v449
        %v555 = vpack.c.bf16 %v460, %v457
        %v556 = vpack.c.bf16 %v468, %v465
        %v557 = vpack.c.bf16 %v476, %v473
        %v558 = vpack.c.bf16 %v484, %v481
        %v559 = vpack.c.bf16 %v492, %v489
        %v560 = vpack.c.bf16 %v500, %v497
        %v561 = vpack.c.bf16 %v508, %v505
        %v562 = vpack.c.bf16 %v516, %v513
        %v563 = vpack.c.bf16 %v524, %v521
        %v564 = vpack.c.bf16 %v532, %v529
        %v565 = vpack.c.bf16 %v540, %v537
        %v566 = vpack.c.bf16 %v548, %v545
        %v583 = vunpack.c.l.b16 %v551
        %v584 = vunpack.c.h.b16 %v551
        %v585 = vunpack.c.l.b16 %v552
        %v586 = vunpack.c.h.b16 %v552
        %v587 = vunpack.c.l.b16 %v553
        %v588 = vunpack.c.h.b16 %v553
        %v589 = vunpack.c.l.b16 %v554
        %v590 = vunpack.c.h.b16 %v554
        %v591 = vunpack.c.l.b16 %v555
        %v592 = vunpack.c.h.b16 %v555
        %v593 = vunpack.c.l.b16 %v556
        %v594 = vunpack.c.h.b16 %v556
        %v595 = vunpack.c.l.b16 %v557
        %v596 = vunpack.c.h.b16 %v557
        %v597 = vunpack.c.l.b16 %v558
        %v598 = vunpack.c.h.b16 %v558
        %v599 = vunpack.c.l.b16 %v559
        %v600 = vunpack.c.h.b16 %v559
        %v601 = vunpack.c.l.b16 %v560
        %v602 = vunpack.c.h.b16 %v560
        %v603 = vunpack.c.l.b16 %v561
        %v604 = vunpack.c.h.b16 %v561
        %v605 = vunpack.c.l.b16 %v562
        %v606 = vunpack.c.h.b16 %v562
        %v607 = vunpack.c.l.b16 %v563
        %v608 = vunpack.c.h.b16 %v563
        %v609 = vunpack.c.l.b16 %v564
        %v610 = vunpack.c.h.b16 %v564
        %v611 = vunpack.c.l.b16 %v565
        %v612 = vunpack.c.h.b16 %v565
        %v613 = vunpack.c.l.b16 %v566
        %v614 = vunpack.c.h.b16 %v566
        %v615 = vpack.c.b16 %v583, %v583
        %v616 = vpack.c.b16 %v584, %v584
        %v617 = vpack.c.b16 %v585, %v585
        %v618 = vpack.c.b16 %v586, %v586
        %v619 = vpack.c.b16 %v587, %v587
        %v620 = vpack.c.b16 %v588, %v588
        %v621 = vpack.c.b16 %v589, %v589
        %v622 = vpack.c.b16 %v590, %v590
        %v623 = vpack.c.b16 %v591, %v591
        %v624 = vpack.c.b16 %v592, %v592
        %v625 = vpack.c.b16 %v593, %v593
        %v626 = vpack.c.b16 %v594, %v594
        %v627 = vpack.c.b16 %v595, %v595
        %v628 = vpack.c.b16 %v596, %v596
        %v629 = vpack.c.b16 %v597, %v597
        %v630 = vpack.c.b16 %v598, %v598
        %v631 = vpack.c.b16 %v599, %v599
        %v632 = vpack.c.b16 %v600, %v600
        %v633 = vpack.c.b16 %v601, %v601
        %v634 = vpack.c.b16 %v602, %v602
        %v635 = vpack.c.b16 %v603, %v603
        %v636 = vpack.c.b16 %v604, %v604
        %v637 = vpack.c.b16 %v605, %v605
        %v638 = vpack.c.b16 %v606, %v606
        %v639 = vpack.c.b16 %v607, %v607
        %v640 = vpack.c.b16 %v608, %v608
        %v641 = vpack.c.b16 %v609, %v609
        %v642 = vpack.c.b16 %v610, %v610
        %v643 = vpack.c.b16 %v611, %v611
        %v644 = vpack.c.b16 %v612, %v612
        %v645 = vpack.c.b16 %v613, %v613
        %v646 = vpack.c.b16 %v614, %v614
        %679 = vst [vmem:[%s194] sm:$0xf] %v615
        %680 = vst [vmem:[%s194 + $0x4] sm:$0xf] %v616
        %681 = vst [vmem:[%s194 + $0x8] sm:$0xf] %v617
        %682 = vst [vmem:[%s194 + $0xc] sm:$0xf] %v618
        %683 = vst [vmem:[%s194 + $0x10] sm:$0xf] %v619
        %684 = vst [vmem:[%s194 + $0x14] sm:$0xf] %v620
        %685 = vst [vmem:[%s194 + $0x18] sm:$0xf] %v621
        %686 = vst [vmem:[%s194 + $0x1c] sm:$0xf] %v622
        %687 = vst [vmem:[%s194 + $0x20] sm:$0xf] %v623
        %688 = vst [vmem:[%s194 + $0x24] sm:$0xf] %v624
        %689 = vst [vmem:[%s194 + $0x28] sm:$0xf] %v625
        %690 = vst [vmem:[%s194 + $0x2c] sm:$0xf] %v626
        %691 = vst [vmem:[%s194 + $0x30] sm:$0xf] %v627
        %692 = vst [vmem:[%s194 + $0x34] sm:$0xf] %v628
        %693 = vst [vmem:[%s194 + $0x38] sm:$0xf] %v629
        %694 = vst [vmem:[%s194 + $0x3c] sm:$0xf] %v630
        %695 = vst [vmem:[%s194 + $0x40] sm:$0xf] %v631
        %696 = vst [vmem:[%s194 + $0x44] sm:$0xf] %v632
        %697 = vst [vmem:[%s194 + $0x48] sm:$0xf] %v633
        %698 = vst [vmem:[%s194 + $0x4c] sm:$0xf] %v634
        %699 = vst [vmem:[%s194 + $0x50] sm:$0xf] %v635
        %700 = vst [vmem:[%s194 + $0x54] sm:$0xf] %v636
        %701 = vst [vmem:[%s194 + $0x58] sm:$0xf] %v637
        %702 = vst [vmem:[%s194 + $0x5c] sm:$0xf] %v638
        %703 = vst [vmem:[%s194 + $0x60] sm:$0xf] %v639
        %704 = vst [vmem:[%s194 + $0x64] sm:$0xf] %v640
        %705 = vst [vmem:[%s194 + $0x68] sm:$0xf] %v641
        %706 = vst [vmem:[%s194 + $0x6c] sm:$0xf] %v642
        %707 = vst [vmem:[%s194 + $0x70] sm:$0xf] %v643
        %708 = vst [vmem:[%s194 + $0x74] sm:$0xf] %v644
        %709 = vst [vmem:[%s194 + $0x78] sm:$0xf] %v645
        %710 = vst [vmem:[%s194 + $0x7c] sm:$0xf] %v646
        %s711 = sand.u32 %s91, 1
        %s712 = scalar_lea.sflag [#allocation4], %s711
        %s713 = sand.u32 %s91, 1
        %s714 = smul.addr %s713, 128
        %s715 = scalar_lea.vmem [#allocation7], %s714
        // Predicated region
        $region37: #{tpu_custom_call.1} parent=27 // pred_check
          %p716 = pneg %p101
        $region38: #{tpu_custom_call.1} parent=27 // pred_check_branch
          %718 = sbr.rel (%p716) target = $region40
        $region39: #{tpu_custom_call.1} parent=27 // pred_region
          %s719 = smul.u32 32, %s25
          %s721 = ssub.s32 2048, 2048
          %722 = vsyncadd %s712, %s721
          %s723 = smul.addr %s24, 32
          %s724 = sadd.s32 %s719, %s723
          %s725 = smul.addr %s724, 64
          %s726 = scalar_lea.hbm %s2, %s725
          %s727 = sshll.u32 %s715, 4
          %s728 = int_to_ptr.vmem [resolvable:$true] %s727
          %733 = dma.vmem_to_hbm [thread:$0]  %s728, 2048, %s726, %s712, 64, 64, 4
        $region40: #{tpu_custom_call.1} parent=27 // pred_fallthru
          _
      $region28: #{tpu_custom_call.1} parent=5 // pred_fallthru
        _
      %p734 = scmp.le.s32.totalorder 2, %s15
      // Predicated region
      $region41: #{tpu_custom_call.1} parent=5 // pred_check
        %p735 = pneg %p734
      $region42: #{tpu_custom_call.1} parent=5 // pred_check_branch
        %737 = sbr.rel (%p735) target = $region44
      $region43: #{tpu_custom_call.1} parent=5 // pred_region
        %s738 = ssub.s32 %s15, 2
        // Predicated region
        $region45: #{tpu_custom_call.1} parent=43 // pred_check
          %p739 = pneg %p107
        $region46: #{tpu_custom_call.1} parent=43 // pred_check_branch
          %741 = sbr.rel (%p739) target = $region48
        $region47: #{tpu_custom_call.1} parent=43 // pred_region
          %s742 = sand.u32 %s92, 1
          %s743 = scalar_lea.sflag [#allocation4], %s742
          %s744 = sand.u32 %s92, 1
          %s745 = smul.addr %s744, 128
          %s746 = scalar_lea.vmem [#allocation7], %s745
          %747 = dma.done %s743, 2048
        $region48: #{tpu_custom_call.1} parent=43 // pred_fallthru
          _
      $region44: #{tpu_custom_call.1} parent=5 // pred_fallthru
        _
    $region6: #{tpu_custom_call.1} parent=1 // loop_footer
      %s19 = sadd.s32 1, %s15
    $region7: #{tpu_custom_call.1} parent=1 // loop_footer_branch
      %14 = sbr.rel target = $region3
    $region8: #{tpu_custom_call.1} parent=1 // loop_exit
      _
    %748 = vsyncpa [#allocation3], 1
    %s749 = scalar_lea.sflag [#allocation3], 1
    %750 = vsyncpa %s749, 1
    %751 = vsyncpa [#allocation6], 1
    %752 = vsyncpa [#allocation4], 1
    %s753 = scalar_lea.sflag [#allocation4], 1
    %754 = vsyncpa %s753, 1

</llo_original>
